<compile_context>
chip_gen: v6e
topology: v6e:2x2x1
jax: 0.10.0
libtpu: 0.0.40
codegen_flags: <defaults>
</compile_context>

<pallas_src>
import functools

import jax
import jax.numpy as jnp
from jax.experimental import pallas as pl
from jax.experimental.pallas import tpu as pltpu

# ---- fixed normalization buffers (from Normalize([0.221*255], [0.242*255])) ----
MEAN = 0.221 * 255.0
INV_STD = 1.0 / (0.242 * 255.0)

NUM_CLASSES = 8     # synthetic backbone output channels
LANES = 512         # lane-dense row width (multiple of 128)


def _round_up(x, m):
    return ((x + m - 1) // m) * m


def _make_kernel(n_classes, rows_tile, lanes, n_valid):
    """n_valid = true pixel count (static); everything past it is masked to 0."""
    tile_pixels = rows_tile * lanes

    def kernel(w_ref, b_ref, x_ref, t_ref, out_ref):
        # w_ref/b_ref: (C,) f32 in SMEM (scalar reads)
        # x_ref: (rows_tile, L) f32 pixels     t_ref: (rows_tile, L) int32 targets
        # out_ref: (1, 1, 1) f32 per-split NLL sum (VMEM-resident accumulator)
        split = pl.program_id(0)
        i = pl.program_id(1)

        @pl.when(i == 0)
        def _init():
            out_ref[...] = jnp.zeros_like(out_ref)

        # Normalize (elementwise, VPU).
        xn = (x_ref[...] - MEAN) * INV_STD                      # (R, L) f32
        tgt = t_ref[...]                                        # (R, L) int32

        # ---- pass 1: running max over classes, logits recomputed on the fly ----
        m = xn * w_ref[0] + b_ref[0]
        for c in range(1, n_classes):
            m = jnp.maximum(m, xn * w_ref[c] + b_ref[c])

        # ---- pass 2: sum-exp and target-picked logit in one class loop ----------
        s = jnp.zeros_like(xn)
        picked = jnp.zeros_like(xn)
        for c in range(n_classes):
            logit_c = xn * w_ref[c] + b_ref[c]                  # 1 recomputed FMA
            s = s + jnp.exp(logit_c - m)
            picked = picked + jnp.where(tgt == c, logit_c, 0.0)

        lse = m + jnp.log(s)

        # Validity mask from the *logical* (unclamped) block position, so padded
        # rows, the partial last block and clamped duplicate blocks contribute 0.
        base = (split * pl.num_programs(1) + i) * tile_pixels
        ridx = jax.lax.broadcasted_iota(jnp.int32, (rows_tile, lanes), 0)
        lidx = jax.lax.broadcasted_iota(jnp.int32, (rows_tile, lanes), 1)
        gidx = base + ridx * lanes + lidx
        nll = jnp.where(gidx < n_valid, lse - picked, 0.0)

        # Single per-step cross-lane reduce into the tiny resident output block.
        out_ref[...] += jnp.sum(nll)

    return kernel


@functools.partial(jax.jit,
                   static_argnames=("lanes", "max_rows_tile", "num_splits",
                                    "core_parallel"))
def segmentation_loss(image, target, weight, bias, *,
                      lanes=LANES, max_rows_tile=256, num_splits=1,
                      core_parallel=False):
    """image: [B,1,H,W] f32 (NCHW), target: [B,H,W] int -> scalar mean cross-entropy."""
    B, Cin, H, W = image.shape
    assert Cin == 1, "synthetic backbone expects a single input channel"
    n_classes = weight.shape[-1]
    M = B * H * W
    L = lanes

    # ---- lane-dense (rows, L) layout; pad only to the 8-row f32 sublane grain ----
    rows = -(-M // L)
    rows_pad = _round_up(rows, 8)
    m_pad = rows_pad * L

    x_flat = image.reshape(M).astype(jnp.float32)   # free reshape (already f32)
    t_flat = target.reshape(M).astype(jnp.int32)    # free if targets arrive int32
    if m_pad != M:
        # Only ragged pixel counts pay this (small) copy; pad values are masked
        # in-kernel via the gidx < M test, so their contents are irrelevant.
        x_flat = jnp.pad(x_flat, (0, m_pad - M))
        t_flat = jnp.pad(t_flat, (0, m_pad - M))
    x2 = x_flat.reshape(rows_pad, L)
    t2 = t_flat.reshape(rows_pad, L)

    rows_tile = min(_round_up(max_rows_tile, 8), rows_pad)
    total_blocks = -(-rows_pad // rows_tile)        # last block may be partial
    steps = -(-total_blocks // num_splits)

    def row_map(c, i):
        # Clamp over-shot block ids (split rounding) onto the last real block;
        # their contribution is zeroed by the in-kernel gidx mask.
        return (jnp.minimum(c * steps + i, total_blocks - 1), 0)

    w = weight.reshape(-1).astype(jnp.float32)      # (C,) conv weights -> SMEM
    b = bias.reshape(-1).astype(jnp.float32)        # (C,) conv biases  -> SMEM
    smem_spec = pl.BlockSpec(memory_space=pltpu.MemorySpace.SMEM)

    # TODO(synk): on v7x set num_splits=2 (and core_parallel=True) so the two
    # TensorCores each reduce half of the pixel stream.
    lead_sem = pltpu.CORE_PARALLEL if core_parallel else "parallel"

    partials = pl.pallas_call(
        _make_kernel(n_classes, rows_tile, L, M),
        out_shape=jax.ShapeDtypeStruct((num_splits, 1, 1), jnp.float32),
        grid_spec=pltpu.PrefetchScalarGridSpec(
            num_scalar_prefetch=0,
            grid=(num_splits, steps),
            in_specs=[
                smem_spec,                                     # weights
                smem_spec,                                     # biases
                pl.BlockSpec((rows_tile, L), row_map),         # pixels
                pl.BlockSpec((rows_tile, L), row_map),         # targets
            ],
            out_specs=pl.BlockSpec((1, 1, 1), lambda c, i: (c, 0, 0)),
        ),
        compiler_params=pltpu.CompilerParams(
            dimension_semantics=(lead_sem, "arbitrary")),
    )(w, b, x2, t2)

    return jnp.sum(partials) / jnp.float32(M)   # CrossEntropyLoss reduction='mean'


def _reference_loss(image, target, weight, bias):
    """Pure-JAX reference mirroring the PyTorch forward."""
    xn = (image.astype(jnp.float32) - MEAN) * INV_STD          # Normalize
    B, Cin, H, W = image.shape
    x = xn.transpose(0, 2, 3, 1).reshape(-1, Cin)
    logits = x @ weight.reshape(Cin, -1) + bias.reshape(1, -1)  # 1x1 conv backbone
    logp = jax.nn.log_softmax(logits, axis=-1)
    t = target.reshape(-1).astype(jnp.int32)
    nll = -jnp.take_along_axis(logp, t[:, None], axis=-1)[:, 0]
    return jnp.mean(nll)


if __name__ == "__main__":
    key = jax.random.PRNGKey(0)
    k_img, k_tgt, k_w, k_b = jax.random.split(key, 4)

    B, Cin, H, W = 2, 1, 64, 64
    C = NUM_CLASSES

    # Deterministic synthetic backbone parameters (1x1 conv: 1 -> C channels)
    weight = jax.random.normal(k_w, (Cin, C), jnp.float32) * 0.1
    bias = jax.random.normal(k_b, (1, C), jnp.float32) * 0.1

    # Config 1: pixel count divides 8*512 -> zero-copy path, single step.
    image = jax.random.uniform(k_img, (B, Cin, H, W), jnp.float32) * 255.0
    target = jax.random.randint(k_tgt, (B, H, W), 0, C, jnp.int32)
    loss = jax.block_until_ready(segmentation_loss(image, target, weight, bias))
    ref = _reference_loss(image, target, weight, bias)
    assert jnp.allclose(loss, ref, rtol=1e-4, atol=1e-4), (loss, ref)

    # Config 2: ragged pixel count -> sub-tile pad + in-kernel tail masking,
    # multi-step accumulation along the "arbitrary" axis.
    B2, H2, W2 = 2, 50, 50
    image2 = jax.random.uniform(k_img, (B2, Cin, H2, W2), jnp.float32) * 255.0
    target2 = jax.random.randint(k_tgt, (B2, H2, W2), 0, C, jnp.int32)
    loss2 = jax.block_until_ready(
        segmentation_loss(image2, target2, weight, bias, max_rows_tile=8))
    ref2 = _reference_loss(image2, target2, weight, bias)
    assert jnp.allclose(loss2, ref2, rtol=1e-4, atol=1e-4), (loss2, ref2)

    # Config 3: rows not a multiple of the tile -> partial last block (masked).
    B3, H3, W3 = 3, 64, 64
    image3 = jax.random.uniform(k_img, (B3, Cin, H3, W3), jnp.float32) * 255.0
    target3 = jax.random.randint(k_tgt, (B3, H3, W3), 0, C, jnp.int32)
    loss3 = jax.block_until_ready(
        segmentation_loss(image3, target3, weight, bias, max_rows_tile=16))
    ref3 = _reference_loss(image3, target3, weight, bias)
    assert jnp.allclose(loss3, ref3, rtol=1e-4, atol=1e-4), (loss3, ref3)

    # Config 4: two-way split with block-id clamping (v7x-style sharding path;
    # just a serial loop on 1-TC chips, but must stay numerically correct).
    loss4 = jax.block_until_ready(
        segmentation_loss(image3, target3, weight, bias,
                          max_rows_tile=8, num_splits=2))
    assert jnp.allclose(loss4, ref3, rtol=1e-4, atol=1e-4), (loss4, ref3)

    print("KERNEL_OK")
</pallas_src>

<mosaic_0001>
module attributes {stable_mosaic.version = 11 : i64} {
  func.func @kernel(%arg0: i32, %arg1: i32, %arg2: memref<8xf32, #tpu.memory_space<smem>>, %arg3: memref<8xf32, #tpu.memory_space<smem>>, %arg4: memref<16x512xf32, #tpu.memory_space<vmem>>, %arg5: memref<16x512xi32, #tpu.memory_space<vmem>>, %arg6: memref<1x1x1xf32, #tpu.memory_space<vmem>>) attributes {dimension_semantics = [#tpu.dimension_semantics<parallel>, #tpu.dimension_semantics<arbitrary>], iteration_bounds = array<i64: 1, 1>, scalar_prefetch = 0 : i64, scratch_operands = 0 : i64, tpu.core_type = #tpu.core_type<tc>, window_params = [{transform_indices = @transform_0, window_bounds = array<i64: 8>}, {transform_indices = @transform_1, window_bounds = array<i64: 8>}, {transform_indices = @transform_2, window_bounds = array<i64: 16, 512>}, {transform_indices = @transform_3, window_bounds = array<i64: 16, 512>}, {transform_indices = @transform_4, window_bounds = array<i64: 1, 1, 1>}]} {
    %c0_i32 = arith.constant 0 : i32
    %0 = arith.cmpi eq, %arg1, %c0_i32 : i32
    %1 = arith.extui %0 : i1 to i32
    %c0_i32_0 = arith.constant 0 : i32
    %2 = arith.cmpi ne, %1, %c0_i32_0 : i32
    scf.if %2 {
      %cst_51 = arith.constant 0.000000e+00 : f32
      %203 = vector.broadcast %cst_51 : f32 to vector<1x1x1xf32>
      %c0_52 = arith.constant 0 : index
      %c0_53 = arith.constant 0 : index
      %c0_54 = arith.constant 0 : index
      %204 = vector.load %arg6[%c0_52, %c0_53, %c0_54] : memref<1x1x1xf32, #tpu.memory_space<vmem>>, vector<1x1x1xf32>
      tpu.vector_store %arg6[%c0_52, %c0_53, %c0_54], %203 {strides = array<i32>} : memref<1x1x1xf32, #tpu.memory_space<vmem>>, vector<1x1x1xf32>,
    } else {
    }
    %c0 = arith.constant 0 : index
    %c0_1 = arith.constant 0 : index
    %3 = vector.load %arg4[%c0, %c0_1] : memref<16x512xf32, #tpu.memory_space<vmem>>, vector<16x512xf32>
    %cst = arith.constant 5.635500e+01 : f32
    %4 = vector.broadcast %cst : f32 to vector<16x512xf32>
    %5 = arith.subf %3, %4 : vector<16x512xf32>
    %cst_2 = arith.constant 0.0162048284 : f32
    %6 = vector.broadcast %cst_2 : f32 to vector<16x512xf32>
    %7 = arith.mulf %5, %6 : vector<16x512xf32>
    %c0_3 = arith.constant 0 : index
    %c0_4 = arith.constant 0 : index
    %8 = vector.load %arg5[%c0_3, %c0_4] : memref<16x512xi32, #tpu.memory_space<vmem>>, vector<16x512xi32>
    %c0_5 = arith.constant 0 : index
    %9 = memref.load %arg2[%c0_5] : memref<8xf32, #tpu.memory_space<smem>>
    %10 = vector.broadcast %9 : f32 to vector<16x512xf32>
    %11 = arith.mulf %7, %10 : vector<16x512xf32>
    %c0_6 = arith.constant 0 : index
    %12 = memref.load %arg3[%c0_6] : memref<8xf32, #tpu.memory_space<smem>>
    %13 = vector.broadcast %12 : f32 to vector<16x512xf32>
    %14 = arith.addf %11, %13 : vector<16x512xf32>
    %c1 = arith.constant 1 : index
    %15 = memref.load %arg2[%c1] : memref<8xf32, #tpu.memory_space<smem>>
    %16 = vector.broadcast %15 : f32 to vector<16x512xf32>
    %17 = arith.mulf %7, %16 : vector<16x512xf32>
    %c1_7 = arith.constant 1 : index
    %18 = memref.load %arg3[%c1_7] : memref<8xf32, #tpu.memory_space<smem>>
    %19 = vector.broadcast %18 : f32 to vector<16x512xf32>
    %20 = arith.addf %17, %19 : vector<16x512xf32>
    %21 = arith.maximumf %14, %20 : vector<16x512xf32>
    %c2 = arith.constant 2 : index
    %22 = memref.load %arg2[%c2] : memref<8xf32, #tpu.memory_space<smem>>
    %23 = vector.broadcast %22 : f32 to vector<16x512xf32>
    %24 = arith.mulf %7, %23 : vector<16x512xf32>
    %c2_8 = arith.constant 2 : index
    %25 = memref.load %arg3[%c2_8] : memref<8xf32, #tpu.memory_space<smem>>
    %26 = vector.broadcast %25 : f32 to vector<16x512xf32>
    %27 = arith.addf %24, %26 : vector<16x512xf32>
    %28 = arith.maximumf %21, %27 : vector<16x512xf32>
    %c3 = arith.constant 3 : index
    %29 = memref.load %arg2[%c3] : memref<8xf32, #tpu.memory_space<smem>>
    %30 = vector.broadcast %29 : f32 to vector<16x512xf32>
    %31 = arith.mulf %7, %30 : vector<16x512xf32>
    %c3_9 = arith.constant 3 : index
    %32 = memref.load %arg3[%c3_9] : memref<8xf32, #tpu.memory_space<smem>>
    %33 = vector.broadcast %32 : f32 to vector<16x512xf32>
    %34 = arith.addf %31, %33 : vector<16x512xf32>
    %35 = arith.maximumf %28, %34 : vector<16x512xf32>
    %c4 = arith.constant 4 : index
    %36 = memref.load %arg2[%c4] : memref<8xf32, #tpu.memory_space<smem>>
    %37 = vector.broadcast %36 : f32 to vector<16x512xf32>
    %38 = arith.mulf %7, %37 : vector<16x512xf32>
    %c4_10 = arith.constant 4 : index
    %39 = memref.load %arg3[%c4_10] : memref<8xf32, #tpu.memory_space<smem>>
    %40 = vector.broadcast %39 : f32 to vector<16x512xf32>
    %41 = arith.addf %38, %40 : vector<16x512xf32>
    %42 = arith.maximumf %35, %41 : vector<16x512xf32>
    %c5 = arith.constant 5 : index
    %43 = memref.load %arg2[%c5] : memref<8xf32, #tpu.memory_space<smem>>
    %44 = vector.broadcast %43 : f32 to vector<16x512xf32>
    %45 = arith.mulf %7, %44 : vector<16x512xf32>
    %c5_11 = arith.constant 5 : index
    %46 = memref.load %arg3[%c5_11] : memref<8xf32, #tpu.memory_space<smem>>
    %47 = vector.broadcast %46 : f32 to vector<16x512xf32>
    %48 = arith.addf %45, %47 : vector<16x512xf32>
    %49 = arith.maximumf %42, %48 : vector<16x512xf32>
    %c6 = arith.constant 6 : index
    %50 = memref.load %arg2[%c6] : memref<8xf32, #tpu.memory_space<smem>>
    %51 = vector.broadcast %50 : f32 to vector<16x512xf32>
    %52 = arith.mulf %7, %51 : vector<16x512xf32>
    %c6_12 = arith.constant 6 : index
    %53 = memref.load %arg3[%c6_12] : memref<8xf32, #tpu.memory_space<smem>>
    %54 = vector.broadcast %53 : f32 to vector<16x512xf32>
    %55 = arith.addf %52, %54 : vector<16x512xf32>
    %56 = arith.maximumf %49, %55 : vector<16x512xf32>
    %c7 = arith.constant 7 : index
    %57 = memref.load %arg2[%c7] : memref<8xf32, #tpu.memory_space<smem>>
    %58 = vector.broadcast %57 : f32 to vector<16x512xf32>
    %59 = arith.mulf %7, %58 : vector<16x512xf32>
    %c7_13 = arith.constant 7 : index
    %60 = memref.load %arg3[%c7_13] : memref<8xf32, #tpu.memory_space<smem>>
    %61 = vector.broadcast %60 : f32 to vector<16x512xf32>
    %62 = arith.addf %59, %61 : vector<16x512xf32>
    %63 = arith.maximumf %56, %62 : vector<16x512xf32>
    %cst_14 = arith.constant 0.000000e+00 : f32
    %64 = vector.broadcast %cst_14 : f32 to vector<16x512xf32>
    %cst_15 = arith.constant 0.000000e+00 : f32
    %65 = vector.broadcast %cst_15 : f32 to vector<16x512xf32>
    %c0_16 = arith.constant 0 : index
    %66 = memref.load %arg2[%c0_16] : memref<8xf32, #tpu.memory_space<smem>>
    %67 = vector.broadcast %66 : f32 to vector<16x512xf32>
    %68 = arith.mulf %7, %67 : vector<16x512xf32>
    %c0_17 = arith.constant 0 : index
    %69 = memref.load %arg3[%c0_17] : memref<8xf32, #tpu.memory_space<smem>>
    %70 = vector.broadcast %69 : f32 to vector<16x512xf32>
    %71 = arith.addf %68, %70 : vector<16x512xf32>
    %72 = arith.subf %71, %63 : vector<16x512xf32>
    %73 = math.exp %72 : vector<16x512xf32>
    %74 = arith.addf %64, %73 : vector<16x512xf32>
    %c0_i32_18 = arith.constant 0 : i32
    %75 = vector.broadcast %c0_i32_18 : i32 to vector<16x512xi32>
    %76 = arith.cmpi eq, %8, %75 : vector<16x512xi32>
    %cst_19 = arith.constant 0.000000e+00 : f32
    %77 = vector.broadcast %cst_19 : f32 to vector<16x512xf32>
    %78 = arith.select %76, %71, %77 : vector<16x512xi1>, vector<16x512xf32>
    %79 = arith.addf %65, %78 : vector<16x512xf32>
    %c1_20 = arith.constant 1 : index
    %80 = memref.load %arg2[%c1_20] : memref<8xf32, #tpu.memory_space<smem>>
    %81 = vector.broadcast %80 : f32 to vector<16x512xf32>
    %82 = arith.mulf %7, %81 : vector<16x512xf32>
    %c1_21 = arith.constant 1 : index
    %83 = memref.load %arg3[%c1_21] : memref<8xf32, #tpu.memory_space<smem>>
    %84 = vector.broadcast %83 : f32 to vector<16x512xf32>
    %85 = arith.addf %82, %84 : vector<16x512xf32>
    %86 = arith.subf %85, %63 : vector<16x512xf32>
    %87 = math.exp %86 : vector<16x512xf32>
    %88 = arith.addf %74, %87 : vector<16x512xf32>
    %c1_i32 = arith.constant 1 : i32
    %89 = vector.broadcast %c1_i32 : i32 to vector<16x512xi32>
    %90 = arith.cmpi eq, %8, %89 : vector<16x512xi32>
    %cst_22 = arith.constant 0.000000e+00 : f32
    %91 = vector.broadcast %cst_22 : f32 to vector<16x512xf32>
    %92 = arith.select %90, %85, %91 : vector<16x512xi1>, vector<16x512xf32>
    %93 = arith.addf %79, %92 : vector<16x512xf32>
    %c2_23 = arith.constant 2 : index
    %94 = memref.load %arg2[%c2_23] : memref<8xf32, #tpu.memory_space<smem>>
    %95 = vector.broadcast %94 : f32 to vector<16x512xf32>
    %96 = arith.mulf %7, %95 : vector<16x512xf32>
    %c2_24 = arith.constant 2 : index
    %97 = memref.load %arg3[%c2_24] : memref<8xf32, #tpu.memory_space<smem>>
    %98 = vector.broadcast %97 : f32 to vector<16x512xf32>
    %99 = arith.addf %96, %98 : vector<16x512xf32>
    %100 = arith.subf %99, %63 : vector<16x512xf32>
    %101 = math.exp %100 : vector<16x512xf32>
    %102 = arith.addf %88, %101 : vector<16x512xf32>
    %c2_i32 = arith.constant 2 : i32
    %103 = vector.broadcast %c2_i32 : i32 to vector<16x512xi32>
    %104 = arith.cmpi eq, %8, %103 : vector<16x512xi32>
    %cst_25 = arith.constant 0.000000e+00 : f32
    %105 = vector.broadcast %cst_25 : f32 to vector<16x512xf32>
    %106 = arith.select %104, %99, %105 : vector<16x512xi1>, vector<16x512xf32>
    %107 = arith.addf %93, %106 : vector<16x512xf32>
    %c3_26 = arith.constant 3 : index
    %108 = memref.load %arg2[%c3_26] : memref<8xf32, #tpu.memory_space<smem>>
    %109 = vector.broadcast %108 : f32 to vector<16x512xf32>
    %110 = arith.mulf %7, %109 : vector<16x512xf32>
    %c3_27 = arith.constant 3 : index
    %111 = memref.load %arg3[%c3_27] : memref<8xf32, #tpu.memory_space<smem>>
    %112 = vector.broadcast %111 : f32 to vector<16x512xf32>
    %113 = arith.addf %110, %112 : vector<16x512xf32>
    %114 = arith.subf %113, %63 : vector<16x512xf32>
    %115 = math.exp %114 : vector<16x512xf32>
    %116 = arith.addf %102, %115 : vector<16x512xf32>
    %c3_i32 = arith.constant 3 : i32
    %117 = vector.broadcast %c3_i32 : i32 to vector<16x512xi32>
    %118 = arith.cmpi eq, %8, %117 : vector<16x512xi32>
    %cst_28 = arith.constant 0.000000e+00 : f32
    %119 = vector.broadcast %cst_28 : f32 to vector<16x512xf32>
    %120 = arith.select %118, %113, %119 : vector<16x512xi1>, vector<16x512xf32>
    %121 = arith.addf %107, %120 : vector<16x512xf32>
    %c4_29 = arith.constant 4 : index
    %122 = memref.load %arg2[%c4_29] : memref<8xf32, #tpu.memory_space<smem>>
    %123 = vector.broadcast %122 : f32 to vector<16x512xf32>
    %124 = arith.mulf %7, %123 : vector<16x512xf32>
    %c4_30 = arith.constant 4 : index
    %125 = memref.load %arg3[%c4_30] : memref<8xf32, #tpu.memory_space<smem>>
    %126 = vector.broadcast %125 : f32 to vector<16x512xf32>
    %127 = arith.addf %124, %126 : vector<16x512xf32>
    %128 = arith.subf %127, %63 : vector<16x512xf32>
    %129 = math.exp %128 : vector<16x512xf32>
    %130 = arith.addf %116, %129 : vector<16x512xf32>
    %c4_i32 = arith.constant 4 : i32
    %131 = vector.broadcast %c4_i32 : i32 to vector<16x512xi32>
    %132 = arith.cmpi eq, %8, %131 : vector<16x512xi32>
    %cst_31 = arith.constant 0.000000e+00 : f32
    %133 = vector.broadcast %cst_31 : f32 to vector<16x512xf32>
    %134 = arith.select %132, %127, %133 : vector<16x512xi1>, vector<16x512xf32>
    %135 = arith.addf %121, %134 : vector<16x512xf32>
    %c5_32 = arith.constant 5 : index
    %136 = memref.load %arg2[%c5_32] : memref<8xf32, #tpu.memory_space<smem>>
    %137 = vector.broadcast %136 : f32 to vector<16x512xf32>
    %138 = arith.mulf %7, %137 : vector<16x512xf32>
    %c5_33 = arith.constant 5 : index
    %139 = memref.load %arg3[%c5_33] : memref<8xf32, #tpu.memory_space<smem>>
    %140 = vector.broadcast %139 : f32 to vector<16x512xf32>
    %141 = arith.addf %138, %140 : vector<16x512xf32>
    %142 = arith.subf %141, %63 : vector<16x512xf32>
    %143 = math.exp %142 : vector<16x512xf32>
    %144 = arith.addf %130, %143 : vector<16x512xf32>
    %c5_i32 = arith.constant 5 : i32
    %145 = vector.broadcast %c5_i32 : i32 to vector<16x512xi32>
    %146 = arith.cmpi eq, %8, %145 : vector<16x512xi32>
    %cst_34 = arith.constant 0.000000e+00 : f32
    %147 = vector.broadcast %cst_34 : f32 to vector<16x512xf32>
    %148 = arith.select %146, %141, %147 : vector<16x512xi1>, vector<16x512xf32>
    %149 = arith.addf %135, %148 : vector<16x512xf32>
    %c6_35 = arith.constant 6 : index
    %150 = memref.load %arg2[%c6_35] : memref<8xf32, #tpu.memory_space<smem>>
    %151 = vector.broadcast %150 : f32 to vector<16x512xf32>
    %152 = arith.mulf %7, %151 : vector<16x512xf32>
    %c6_36 = arith.constant 6 : index
    %153 = memref.load %arg3[%c6_36] : memref<8xf32, #tpu.memory_space<smem>>
    %154 = vector.broadcast %153 : f32 to vector<16x512xf32>
    %155 = arith.addf %152, %154 : vector<16x512xf32>
    %156 = arith.subf %155, %63 : vector<16x512xf32>
    %157 = math.exp %156 : vector<16x512xf32>
    %158 = arith.addf %144, %157 : vector<16x512xf32>
    %c6_i32 = arith.constant 6 : i32
    %159 = vector.broadcast %c6_i32 : i32 to vector<16x512xi32>
    %160 = arith.cmpi eq, %8, %159 : vector<16x512xi32>
    %cst_37 = arith.constant 0.000000e+00 : f32
    %161 = vector.broadcast %cst_37 : f32 to vector<16x512xf32>
    %162 = arith.select %160, %155, %161 : vector<16x512xi1>, vector<16x512xf32>
    %163 = arith.addf %149, %162 : vector<16x512xf32>
    %c7_38 = arith.constant 7 : index
    %164 = memref.load %arg2[%c7_38] : memref<8xf32, #tpu.memory_space<smem>>
    %165 = vector.broadcast %164 : f32 to vector<16x512xf32>
    %166 = arith.mulf %7, %165 : vector<16x512xf32>
    %c7_39 = arith.constant 7 : index
    %167 = memref.load %arg3[%c7_39] : memref<8xf32, #tpu.memory_space<smem>>
    %168 = vector.broadcast %167 : f32 to vector<16x512xf32>
    %169 = arith.addf %166, %168 : vector<16x512xf32>
    %170 = arith.subf %169, %63 : vector<16x512xf32>
    %171 = math.exp %170 : vector<16x512xf32>
    %172 = arith.addf %158, %171 : vector<16x512xf32>
    %c7_i32 = arith.constant 7 : i32
    %173 = vector.broadcast %c7_i32 : i32 to vector<16x512xi32>
    %174 = arith.cmpi eq, %8, %173 : vector<16x512xi32>
    %cst_40 = arith.constant 0.000000e+00 : f32
    %175 = vector.broadcast %cst_40 : f32 to vector<16x512xf32>
    %176 = arith.select %174, %169, %175 : vector<16x512xi1>, vector<16x512xf32>
    %177 = arith.addf %163, %176 : vector<16x512xf32>
    %178 = math.log %172 : vector<16x512xf32>
    %179 = arith.addf %63, %178 : vector<16x512xf32>
    %c1_i32_41 = arith.constant 1 : i32
    %180 = arith.muli %arg0, %c1_i32_41 : i32
    %181 = arith.addi %180, %arg1 : i32
    %c8192_i32 = arith.constant 8192 : i32
    %182 = arith.muli %181, %c8192_i32 : i32
    %183 = tpu.iota {dimensions = array<i32: 0>} : vector<16x512xi32>
    %184 = tpu.iota {dimensions = array<i32: 1>} : vector<16x512xi32>
    %c512_i32 = arith.constant 512 : i32
    %185 = vector.broadcast %c512_i32 : i32 to vector<16x512xi32>
    %186 = arith.muli %183, %185 : vector<16x512xi32>
    %187 = vector.broadcast %182 : i32 to vector<16x512xi32>
    %188 = arith.addi %187, %186 : vector<16x512xi32>
    %189 = arith.addi %188, %184 : vector<16x512xi32>
    %c8192_i32_42 = arith.constant 8192 : i32
    %190 = vector.broadcast %c8192_i32_42 : i32 to vector<16x512xi32>
    %191 = arith.cmpi slt, %189, %190 : vector<16x512xi32>
    %192 = arith.subf %179, %177 : vector<16x512xf32>
    %cst_43 = arith.constant 0.000000e+00 : f32
    %193 = vector.broadcast %cst_43 : f32 to vector<16x512xf32>
    %194 = arith.select %191, %192, %193 : vector<16x512xi1>, vector<16x512xf32>
    %c0_44 = arith.constant 0 : index
    %c0_45 = arith.constant 0 : index
    %c0_46 = arith.constant 0 : index
    %195 = vector.load %arg6[%c0_44, %c0_45, %c0_46] : memref<1x1x1xf32, #tpu.memory_space<vmem>>, vector<1x1x1xf32>
    %196 = vector.shape_cast %194 : vector<16x512xf32> to vector<1x16x512xf32>
    %cst_47 = arith.constant dense<0.000000e+00> : vector<1xf32>
    %197 = vector.multi_reduction <add>, %196, %cst_47 [1, 2] : vector<1x16x512xf32> to vector<1xf32>
    %198 = vector.shape_cast %197 : vector<1xf32> to vector<1x1x1xf32>
    %199 = vector.extract %198[0, 0, 0] : f32 from vector<1x1x1xf32>
    %200 = vector.broadcast %199 : f32 to vector<1x1x1xf32>
    %201 = arith.addf %195, %200 : vector<1x1x1xf32>
    %c0_48 = arith.constant 0 : index
    %c0_49 = arith.constant 0 : index
    %c0_50 = arith.constant 0 : index
    %202 = vector.load %arg6[%c0_48, %c0_49, %c0_50] : memref<1x1x1xf32, #tpu.memory_space<vmem>>, vector<1x1x1xf32>
    tpu.vector_store %arg6[%c0_48, %c0_49, %c0_50], %201 {strides = array<i32>} : memref<1x1x1xf32, #tpu.memory_space<vmem>>, vector<1x1x1xf32>,
    return
  }
  func.func @transform_0(%arg0: i32, %arg1: i32) -> i32 {
    %c0_i32 = arith.constant 0 : i32
    %c0_i32_0 = arith.constant 0 : i32
    return %c0_i32 : i32
  }
  func.func @transform_1(%arg0: i32, %arg1: i32) -> i32 {
    %c0_i32 = arith.constant 0 : i32
    %c0_i32_0 = arith.constant 0 : i32
    return %c0_i32 : i32
  }
  func.func @transform_2(%arg0: i32, %arg1: i32) -> (i32, i32) {
    %c1_i32 = arith.constant 1 : i32
    %0 = arith.muli %arg0, %c1_i32 : i32
    %1 = arith.addi %0, %arg1 : i32
    %c0_i32 = arith.constant 0 : i32
    %2 = arith.minsi %1, %c0_i32 : i32
    %c0_i32_0 = arith.constant 0 : i32
    %c0_i32_1 = arith.constant 0 : i32
    return %2, %c0_i32_0 : i32, i32
  }
  func.func @transform_3(%arg0: i32, %arg1: i32) -> (i32, i32) {
    %c1_i32 = arith.constant 1 : i32
    %0 = arith.muli %arg0, %c1_i32 : i32
    %1 = arith.addi %0, %arg1 : i32
    %c0_i32 = arith.constant 0 : i32
    %2 = arith.minsi %1, %c0_i32 : i32
    %c0_i32_0 = arith.constant 0 : i32
    %c0_i32_1 = arith.constant 0 : i32
    return %2, %c0_i32_0 : i32, i32
  }
  func.func @transform_4(%arg0: i32, %arg1: i32) -> (i32, i32, i32) {
    %c0_i32 = arith.constant 0 : i32
    %c0_i32_0 = arith.constant 0 : i32
    %c0_i32_1 = arith.constant 0 : i32
    return %arg0, %c0_i32, %c0_i32_0 : i32, i32, i32
  }
}

</mosaic_0001>

<llo_original>
// kernel: segmentation_loss.1
$region0: #{segmentation_loss.1}
  #allocation0 [shape = 'u32[]', space=smem, size = 0x4, offset = 0x4, fixed_abs, tag = 'smem constant byte address 0x4 - core index']
  #allocation1 [shape = 'u32[144,128]{1,0:T(1,128)}', space=vmem, size = 0x12000, scoped, tag = 'internal scratch']
  %s0 = inlined_call_operand.vmem [shape: f32[8], index: 0, kind: input, shape index: {}]
  %s1 = inlined_call_operand.vmem [shape: f32[8], index: 1, kind: input, shape index: {}]
  %s2 = inlined_call_operand.vmem [shape: f32[16,512], index: 2, kind: input, shape index: {}]
  %s3 = inlined_call_operand.vmem [shape: s32[16,512], index: 3, kind: input, shape index: {}]
  %s4 = inlined_call_operand.hbm [shape: f32[1,1,1], index: 4, kind: output, shape index: {}]
  %s5 = sld [smem:[#allocation0]]
  $region38: #{segmentation_loss.1} parent=0
    _
  %s7 = ssub.s32 1, %s5
  %s8 = scalar_select 0, %s7, %s5
  $region1: #{segmentation_loss.1} parent=0
    #allocation2 [shape = 'u8[512]{0}', space=smem, size = 0x200, scoped, tag = 'input window, operand 0, single buffered']
    #allocation3 [shape = 's32[1]{0}', space=sflag, size = 0x4, scoped, tag = 'scoped memory for segmentation_loss.1']
    #allocation4 [shape = 's32[1]{0}', space=sflag, size = 0x4, scoped, tag = 'scoped memory for segmentation_loss.1']
    #allocation5 [shape = 'u8[512]{0}', space=smem, size = 0x200, scoped, tag = 'input window, operand 1, single buffered']
    #allocation6 [shape = 's32[1]{0}', space=sflag, size = 0x4, scoped, tag = 'scoped memory for segmentation_loss.1']
    #allocation7 [shape = 'u8[512]{0}', space=vmem, size = 0x400, scoped, tag = 'output window, operand 0, single buffered']
    %9 = vsyncpa [#allocation4], 0
    %10 = vsyncpa [#allocation6], 0
    %11 = vsyncpa [#allocation3], 0
    // Predicated region
    $region2: #{segmentation_loss.1} parent=1 // pred_check
      _
    $region3: #{segmentation_loss.1} parent=1 // pred_check_branch
      %13 = sbr.rel (0) target = $region5
    $region4: #{segmentation_loss.1} parent=1 // pred_region
      %s15 = ssub.s32 16, 16
      %16 = vsyncadd [#allocation4], %s15
      %s18 = sshll.u32 %s0, 4
      %s19 = int_to_ptr.vmem [resolvable:$true] %s18
      %21 = dma.vmem_to_smem %s19, 16, [#allocation2], [#allocation4]
    $region5: #{segmentation_loss.1} parent=1 // pred_fallthru
      _
    // Predicated region
    $region6: #{segmentation_loss.1} parent=1 // pred_check
      _
    $region7: #{segmentation_loss.1} parent=1 // pred_check_branch
      %23 = sbr.rel (0) target = $region9
    $region8: #{segmentation_loss.1} parent=1 // pred_region
      %s25 = ssub.s32 16, 16
      %26 = vsyncadd [#allocation6], %s25
      %s28 = sshll.u32 %s1, 4
      %s29 = int_to_ptr.vmem [resolvable:$true] %s28
      %31 = dma.vmem_to_smem %s29, 16, [#allocation5], [#allocation6]
    $region9: #{segmentation_loss.1} parent=1 // pred_fallthru
      _
    // Predicated region
    $region10: #{segmentation_loss.1} parent=1 // pred_check
      _
    $region11: #{segmentation_loss.1} parent=1 // pred_check_branch
      %33 = sbr.rel (0) target = $region13
    $region12: #{segmentation_loss.1} parent=1 // pred_region
      %s34 = sadd.s32 0, 0
      %p35 = scmp.lt.s32.totalorder %s34, 0
      %s36 = scalar_select %p35, %s34, 0
      %s37 = smul.u32 2, %s36
      %p38 = scmp.lt.s32.totalorder %s37, 1
      %s39 = scalar_select %p38, %s37, 1
      %s40 = smul.addr %s39, 4
      %s41 = smul.addr %s40, 8
      %s42 = scalar_lea.vmem %s2, %s41
      %s43 = sadd.s32 0, 0
      %p44 = scmp.lt.s32.totalorder %s43, 0
      %s45 = scalar_select %p44, %s43, 0
      %s46 = smul.u32 2, %s45
    $region13: #{segmentation_loss.1} parent=1 // pred_fallthru
      _
    // Predicated region
    $region14: #{segmentation_loss.1} parent=1 // pred_check
      _
    $region15: #{segmentation_loss.1} parent=1 // pred_check_branch
      %48 = sbr.rel (0) target = $region17
    $region16: #{segmentation_loss.1} parent=1 // pred_region
      %s49 = sadd.s32 0, 0
      %p50 = scmp.lt.s32.totalorder %s49, 0
      %s51 = scalar_select %p50, %s49, 0
      %s52 = smul.u32 2, %s51
      %p53 = scmp.lt.s32.totalorder %s52, 1
      %s54 = scalar_select %p53, %s52, 1
      %s55 = smul.addr %s54, 4
      %s56 = smul.addr %s55, 8
      %s57 = scalar_lea.vmem %s3, %s56
      %s58 = sadd.s32 0, 0
      %p59 = scmp.lt.s32.totalorder %s58, 0
      %s60 = scalar_select %p59, %s58, 0
      %s61 = smul.u32 2, %s60
    $region17: #{segmentation_loss.1} parent=1 // pred_fallthru
      _
    // Predicated region
    $region18: #{segmentation_loss.1} parent=1 // pred_check
      _
    $region19: #{segmentation_loss.1} parent=1 // pred_check_branch
      %63 = sbr.rel (0) target = $region21
    $region20: #{segmentation_loss.1} parent=1 // pred_region
      %64 = dma.done [#allocation4], 16
    $region21: #{segmentation_loss.1} parent=1 // pred_fallthru
      _
    // Predicated region
    $region22: #{segmentation_loss.1} parent=1 // pred_check
      _
    $region23: #{segmentation_loss.1} parent=1 // pred_check_branch
      %66 = sbr.rel (0) target = $region25
    $region24: #{segmentation_loss.1} parent=1 // pred_region
      %67 = dma.done [#allocation6], 16
    $region25: #{segmentation_loss.1} parent=1 // pred_fallthru
      _
    %68 = sfence
    %s69 = sadd.s32 0, 0
    %p70 = scmp.lt.s32.totalorder %s69, 0
    %s71 = scalar_select %p70, %s69, 0
    %s72 = smul.u32 2, %s71
    %p73 = scmp.lt.s32.totalorder %s72, 1
    %s74 = scalar_select %p73, %s72, 1
    %s75 = smul.addr %s74, 4
    %s76 = smul.addr %s75, 8
    %s77 = scalar_lea.vmem %s2, %s76
    %s78 = sadd.s32 0, 0
    %p79 = scmp.lt.s32.totalorder %s78, 0
    %s80 = scalar_select %p79, %s78, 0
    %s81 = smul.u32 2, %s80
    %p82 = scmp.lt.s32.totalorder %s81, 1
    %s83 = scalar_select %p82, %s81, 1
    %s84 = smul.addr %s83, 4
    %s85 = smul.addr %s84, 8
    %s86 = scalar_lea.vmem %s3, %s85
    %s87 = sadd.s32 0, 0
    %p88 = scmp.lt.s32.totalorder %s87, 0
    %s89 = scalar_select %p88, %s87, 0
    %s90 = smul.u32 2, %s89
    %p91 = scmp.lt.s32.totalorder %s90, 1
    %s92 = scalar_select %p91, %s90, 1
    %s93 = smul.addr %s92, 4
    %s94 = smul.addr %s93, 8
    %s95 = scalar_lea.vmem %s2, %s94
    %s96 = sadd.s32 0, 0
    %p97 = scmp.lt.s32.totalorder %s96, 0
    %s98 = scalar_select %p97, %s96, 0
    %s99 = smul.u32 2, %s98
    %s100 = sadd.s32 0, 0
    %p101 = scmp.lt.s32.totalorder %s100, 0
    %s102 = scalar_select %p101, %s100, 0
    %s103 = smul.u32 2, %s102
    %p104 = scmp.lt.s32.totalorder %s103, 1
    %s105 = scalar_select %p104, %s103, 1
    %s106 = smul.addr %s105, 4
    %s107 = smul.addr %s106, 8
    %s108 = scalar_lea.vmem %s3, %s107
    %s109 = sadd.s32 0, 0
    %p110 = scmp.lt.s32.totalorder %s109, 0
    %s111 = scalar_select %p110, %s109, 0
    %s112 = smul.u32 2, %s111
    %p113 = scmp.eq.s32.totalorder 0, 0
    // Predicated region
    $region26: #{segmentation_loss.1} parent=1 // pred_check
      %p114 = pneg %p113
    $region27: #{segmentation_loss.1} parent=1 // pred_check_branch
      %116 = sbr.rel (%p114) target = $region29
    $region28: #{segmentation_loss.1} parent=1 // pred_region
      %vm117 = vcmask 0
      %118 = vst.msk [vmem:[#allocation7] sm:$0x1] %vm117, 0.0
    $region29: #{segmentation_loss.1} parent=1 // pred_fallthru
      _
    %v119 = vld [vmem:[%s95] sm:$0xff]
    %v120 = vld [vmem:[%s95 + $0x8] sm:$0xff]
    %v121 = vld [vmem:[%s95 + $0x10] sm:$0xff]
    %v122 = vld [vmem:[%s95 + $0x18] sm:$0xff]
    %v123 = vld [vmem:[%s95 + $0x20] sm:$0xff]
    %v124 = vld [vmem:[%s95 + $0x28] sm:$0xff]
    %v125 = vld [vmem:[%s95 + $0x30] sm:$0xff]
    %v126 = vld [vmem:[%s95 + $0x38] sm:$0xff]
    %v127 = vsub.f32 %v119, 56.355
    %v128 = vsub.f32 %v120, 56.355
    %v129 = vsub.f32 %v121, 56.355
    %v130 = vsub.f32 %v122, 56.355
    %v131 = vsub.f32 %v123, 56.355
    %v132 = vsub.f32 %v124, 56.355
    %v133 = vsub.f32 %v125, 56.355
    %v134 = vsub.f32 %v126, 56.355
    %v135 = vmul.f32 %v127, 0.016204828
    %v136 = vmul.f32 %v128, 0.016204828
    %v137 = vmul.f32 %v129, 0.016204828
    %v138 = vmul.f32 %v130, 0.016204828
    %v139 = vmul.f32 %v131, 0.016204828
    %v140 = vmul.f32 %v132, 0.016204828
    %v141 = vmul.f32 %v133, 0.016204828
    %v142 = vmul.f32 %v134, 0.016204828
    %v143 = vld [vmem:[%s108] sm:$0xff]
    %v144 = vld [vmem:[%s108 + $0x8] sm:$0xff]
    %v145 = vld [vmem:[%s108 + $0x10] sm:$0xff]
    %v146 = vld [vmem:[%s108 + $0x18] sm:$0xff]
    %v147 = vld [vmem:[%s108 + $0x20] sm:$0xff]
    %v148 = vld [vmem:[%s108 + $0x28] sm:$0xff]
    %v149 = vld [vmem:[%s108 + $0x30] sm:$0xff]
    %v150 = vld [vmem:[%s108 + $0x38] sm:$0xff]
    %s151 = sld [smem:[#allocation2]]
    %v152 = vstv %s151
    %v153 = vmul.f32 %v135, %v152
    %v154 = vmul.f32 %v136, %v152
    %v155 = vmul.f32 %v137, %v152
    %v156 = vmul.f32 %v138, %v152
    %v157 = vmul.f32 %v139, %v152
    %v158 = vmul.f32 %v140, %v152
    %v159 = vmul.f32 %v141, %v152
    %v160 = vmul.f32 %v142, %v152
    %s161 = sld [smem:[#allocation5]]
    %v162 = vstv %s161
    %v163 = vadd.f32 %v153, %v162
    %v164 = vadd.f32 %v154, %v162
    %v165 = vadd.f32 %v155, %v162
    %v166 = vadd.f32 %v156, %v162
    %v167 = vadd.f32 %v157, %v162
    %v168 = vadd.f32 %v158, %v162
    %v169 = vadd.f32 %v159, %v162
    %v170 = vadd.f32 %v160, %v162
    %s171 = sld [smem:[#allocation2 + $0x1]]
    %v172 = vstv %s171
    %v173 = vmul.f32 %v135, %v172
    %v174 = vmul.f32 %v136, %v172
    %v175 = vmul.f32 %v137, %v172
    %v176 = vmul.f32 %v138, %v172
    %v177 = vmul.f32 %v139, %v172
    %v178 = vmul.f32 %v140, %v172
    %v179 = vmul.f32 %v141, %v172
    %v180 = vmul.f32 %v142, %v172
    %s181 = sld [smem:[#allocation5 + $0x1]]
    %v182 = vstv %s181
    %v183 = vadd.f32 %v173, %v182
    %v184 = vadd.f32 %v174, %v182
    %v185 = vadd.f32 %v175, %v182
    %v186 = vadd.f32 %v176, %v182
    %v187 = vadd.f32 %v177, %v182
    %v188 = vadd.f32 %v178, %v182
    %v189 = vadd.f32 %v179, %v182
    %v190 = vadd.f32 %v180, %v182
    %v191 = vmax.f32 %v163, %v183
    %v192 = vmax.f32 %v164, %v184
    %v193 = vmax.f32 %v165, %v185
    %v194 = vmax.f32 %v166, %v186
    %v195 = vmax.f32 %v167, %v187
    %v196 = vmax.f32 %v168, %v188
    %v197 = vmax.f32 %v169, %v189
    %v198 = vmax.f32 %v170, %v190
    %s199 = sld [smem:[#allocation2 + $0x2]]
    %v200 = vstv %s199
    %v201 = vmul.f32 %v135, %v200
    %v202 = vmul.f32 %v136, %v200
    %v203 = vmul.f32 %v137, %v200
    %v204 = vmul.f32 %v138, %v200
    %v205 = vmul.f32 %v139, %v200
    %v206 = vmul.f32 %v140, %v200
    %v207 = vmul.f32 %v141, %v200
    %v208 = vmul.f32 %v142, %v200
    %s209 = sld [smem:[#allocation5 + $0x2]]
    %v210 = vstv %s209
    %v211 = vadd.f32 %v201, %v210
    %v212 = vadd.f32 %v202, %v210
    %v213 = vadd.f32 %v203, %v210
    %v214 = vadd.f32 %v204, %v210
    %v215 = vadd.f32 %v205, %v210
    %v216 = vadd.f32 %v206, %v210
    %v217 = vadd.f32 %v207, %v210
    %v218 = vadd.f32 %v208, %v210
    %v219 = vmax.f32 %v191, %v211
    %v220 = vmax.f32 %v192, %v212
    %v221 = vmax.f32 %v193, %v213
    %v222 = vmax.f32 %v194, %v214
    %v223 = vmax.f32 %v195, %v215
    %v224 = vmax.f32 %v196, %v216
    %v225 = vmax.f32 %v197, %v217
    %v226 = vmax.f32 %v198, %v218
    %s227 = sld [smem:[#allocation2 + $0x3]]
    %v228 = vstv %s227
    %v229 = vmul.f32 %v135, %v228
    %v230 = vmul.f32 %v136, %v228
    %v231 = vmul.f32 %v137, %v228
    %v232 = vmul.f32 %v138, %v228
    %v233 = vmul.f32 %v139, %v228
    %v234 = vmul.f32 %v140, %v228
    %v235 = vmul.f32 %v141, %v228
    %v236 = vmul.f32 %v142, %v228
    %s237 = sld [smem:[#allocation5 + $0x3]]
    %v238 = vstv %s237
    %v239 = vadd.f32 %v229, %v238
    %v240 = vadd.f32 %v230, %v238
    %v241 = vadd.f32 %v231, %v238
    %v242 = vadd.f32 %v232, %v238
    %v243 = vadd.f32 %v233, %v238
    %v244 = vadd.f32 %v234, %v238
    %v245 = vadd.f32 %v235, %v238
    %v246 = vadd.f32 %v236, %v238
    %v247 = vmax.f32 %v219, %v239
    %v248 = vmax.f32 %v220, %v240
    %v249 = vmax.f32 %v221, %v241
    %v250 = vmax.f32 %v222, %v242
    %v251 = vmax.f32 %v223, %v243
    %v252 = vmax.f32 %v224, %v244
    %v253 = vmax.f32 %v225, %v245
    %v254 = vmax.f32 %v226, %v246
    %s255 = sld [smem:[#allocation2 + $0x4]]
    %v256 = vstv %s255
    %v257 = vmul.f32 %v135, %v256
    %v258 = vmul.f32 %v136, %v256
    %v259 = vmul.f32 %v137, %v256
    %v260 = vmul.f32 %v138, %v256
    %v261 = vmul.f32 %v139, %v256
    %v262 = vmul.f32 %v140, %v256
    %v263 = vmul.f32 %v141, %v256
    %v264 = vmul.f32 %v142, %v256
    %s265 = sld [smem:[#allocation5 + $0x4]]
    %v266 = vstv %s265
    %v267 = vadd.f32 %v257, %v266
    %v268 = vadd.f32 %v258, %v266
    %v269 = vadd.f32 %v259, %v266
    %v270 = vadd.f32 %v260, %v266
    %v271 = vadd.f32 %v261, %v266
    %v272 = vadd.f32 %v262, %v266
    %v273 = vadd.f32 %v263, %v266
    %v274 = vadd.f32 %v264, %v266
    %v275 = vmax.f32 %v247, %v267
    %v276 = vmax.f32 %v248, %v268
    %v277 = vmax.f32 %v249, %v269
    %v278 = vmax.f32 %v250, %v270
    %v279 = vmax.f32 %v251, %v271
    %v280 = vmax.f32 %v252, %v272
    %v281 = vmax.f32 %v253, %v273
    %v282 = vmax.f32 %v254, %v274
    %s283 = sld [smem:[#allocation2 + $0x5]]
    %v284 = vstv %s283
    %v285 = vmul.f32 %v135, %v284
    %v286 = vmul.f32 %v136, %v284
    %v287 = vmul.f32 %v137, %v284
    %v288 = vmul.f32 %v138, %v284
    %v289 = vmul.f32 %v139, %v284
    %v290 = vmul.f32 %v140, %v284
    %v291 = vmul.f32 %v141, %v284
    %v292 = vmul.f32 %v142, %v284
    %s293 = sld [smem:[#allocation5 + $0x5]]
    %v294 = vstv %s293
    %v295 = vadd.f32 %v285, %v294
    %v296 = vadd.f32 %v286, %v294
    %v297 = vadd.f32 %v287, %v294
    %v298 = vadd.f32 %v288, %v294
    %v299 = vadd.f32 %v289, %v294
    %v300 = vadd.f32 %v290, %v294
    %v301 = vadd.f32 %v291, %v294
    %v302 = vadd.f32 %v292, %v294
    %v303 = vmax.f32 %v275, %v295
    %v304 = vmax.f32 %v276, %v296
    %v305 = vmax.f32 %v277, %v297
    %v306 = vmax.f32 %v278, %v298
    %v307 = vmax.f32 %v279, %v299
    %v308 = vmax.f32 %v280, %v300
    %v309 = vmax.f32 %v281, %v301
    %v310 = vmax.f32 %v282, %v302
    %s311 = sld [smem:[#allocation2 + $0x6]]
    %v312 = vstv %s311
    %v313 = vmul.f32 %v135, %v312
    %v314 = vmul.f32 %v136, %v312
    %v315 = vmul.f32 %v137, %v312
    %v316 = vmul.f32 %v138, %v312
    %v317 = vmul.f32 %v139, %v312
    %v318 = vmul.f32 %v140, %v312
    %v319 = vmul.f32 %v141, %v312
    %v320 = vmul.f32 %v142, %v312
    %s321 = sld [smem:[#allocation5 + $0x6]]
    %v322 = vstv %s321
    %v323 = vadd.f32 %v313, %v322
    %v324 = vadd.f32 %v314, %v322
    %v325 = vadd.f32 %v315, %v322
    %v326 = vadd.f32 %v316, %v322
    %v327 = vadd.f32 %v317, %v322
    %v328 = vadd.f32 %v318, %v322
    %v329 = vadd.f32 %v319, %v322
    %v330 = vadd.f32 %v320, %v322
    %v331 = vmax.f32 %v303, %v323
    %v332 = vmax.f32 %v304, %v324
    %v333 = vmax.f32 %v305, %v325
    %v334 = vmax.f32 %v306, %v326
    %v335 = vmax.f32 %v307, %v327
    %v336 = vmax.f32 %v308, %v328
    %v337 = vmax.f32 %v309, %v329
    %v338 = vmax.f32 %v310, %v330
    %s339 = sld [smem:[#allocation2 + $0x7]]
    %v340 = vstv %s339
    %v341 = vmul.f32 %v135, %v340
    %v342 = vmul.f32 %v136, %v340
    %v343 = vmul.f32 %v137, %v340
    %v344 = vmul.f32 %v138, %v340
    %v345 = vmul.f32 %v139, %v340
    %v346 = vmul.f32 %v140, %v340
    %v347 = vmul.f32 %v141, %v340
    %v348 = vmul.f32 %v142, %v340
    %s349 = sld [smem:[#allocation5 + $0x7]]
    %v350 = vstv %s349
    %v351 = vadd.f32 %v341, %v350
    %v352 = vadd.f32 %v342, %v350
    %v353 = vadd.f32 %v343, %v350
    %v354 = vadd.f32 %v344, %v350
    %v355 = vadd.f32 %v345, %v350
    %v356 = vadd.f32 %v346, %v350
    %v357 = vadd.f32 %v347, %v350
    %v358 = vadd.f32 %v348, %v350
    %v359 = vmax.f32 %v331, %v351
    %v360 = vmax.f32 %v332, %v352
    %v361 = vmax.f32 %v333, %v353
    %v362 = vmax.f32 %v334, %v354
    %v363 = vmax.f32 %v335, %v355
    %v364 = vmax.f32 %v336, %v356
    %v365 = vmax.f32 %v337, %v357
    %v366 = vmax.f32 %v338, %v358
    %v367 = vsub.f32 %v163, %v359
    %v368 = vsub.f32 %v164, %v360
    %v369 = vsub.f32 %v165, %v361
    %v370 = vsub.f32 %v166, %v362
    %v371 = vsub.f32 %v167, %v363
    %v372 = vsub.f32 %v168, %v364
    %v373 = vsub.f32 %v169, %v365
    %v374 = vsub.f32 %v170, %v366
    %v375 = vmul.f32 %v367, 1.442695
    %v376 = vpow.pop %v375
    %v377 = vmul.f32 %v368, 1.442695
    %v378 = vpow.pop %v377
    %v379 = vmul.f32 %v369, 1.442695
    %v380 = vpow.pop %v379
    %v381 = vmul.f32 %v370, 1.442695
    %v382 = vpow.pop %v381
    %v383 = vmul.f32 %v371, 1.442695
    %v384 = vpow.pop %v383
    %v385 = vmul.f32 %v372, 1.442695
    %v386 = vpow.pop %v385
    %v387 = vmul.f32 %v373, 1.442695
    %v388 = vpow.pop %v387
    %v389 = vmul.f32 %v374, 1.442695
    %v390 = vpow.pop %v389
    %v391 = vadd.f32 %v376, 0.0
    %v392 = vadd.f32 %v378, 0.0
    %v393 = vadd.f32 %v380, 0.0
    %v394 = vadd.f32 %v382, 0.0
    %v395 = vadd.f32 %v384, 0.0
    %v396 = vadd.f32 %v386, 0.0
    %v397 = vadd.f32 %v388, 0.0
    %v398 = vadd.f32 %v390, 0.0
    %vm399 = vcmp.eq.s32.totalorder %v143, 0
    %vm400 = vcmp.eq.s32.totalorder %v144, 0
    %vm401 = vcmp.eq.s32.totalorder %v145, 0
    %vm402 = vcmp.eq.s32.totalorder %v146, 0
    %vm403 = vcmp.eq.s32.totalorder %v147, 0
    %vm404 = vcmp.eq.s32.totalorder %v148, 0
    %vm405 = vcmp.eq.s32.totalorder %v149, 0
    %vm406 = vcmp.eq.s32.totalorder %v150, 0
    %v407 = vsel %vm399, %v163, 0.0
    %v408 = vsel %vm400, %v164, 0.0
    %v409 = vsel %vm401, %v165, 0.0
    %v410 = vsel %vm402, %v166, 0.0
    %v411 = vsel %vm403, %v167, 0.0
    %v412 = vsel %vm404, %v168, 0.0
    %v413 = vsel %vm405, %v169, 0.0
    %v414 = vsel %vm406, %v170, 0.0
    %v415 = vadd.f32 %v407, 0.0
    %v416 = vadd.f32 %v408, 0.0
    %v417 = vadd.f32 %v409, 0.0
    %v418 = vadd.f32 %v410, 0.0
    %v419 = vadd.f32 %v411, 0.0
    %v420 = vadd.f32 %v412, 0.0
    %v421 = vadd.f32 %v413, 0.0
    %v422 = vadd.f32 %v414, 0.0
    %v423 = vsub.f32 %v183, %v359
    %v424 = vsub.f32 %v184, %v360
    %v425 = vsub.f32 %v185, %v361
    %v426 = vsub.f32 %v186, %v362
    %v427 = vsub.f32 %v187, %v363
    %v428 = vsub.f32 %v188, %v364
    %v429 = vsub.f32 %v189, %v365
    %v430 = vsub.f32 %v190, %v366
    %v431 = vmul.f32 %v423, 1.442695
    %v432 = vpow.pop %v431
    %v433 = vmul.f32 %v424, 1.442695
    %v434 = vpow.pop %v433
    %v435 = vmul.f32 %v425, 1.442695
    %v436 = vpow.pop %v435
    %v437 = vmul.f32 %v426, 1.442695
    %v438 = vpow.pop %v437
    %v439 = vmul.f32 %v427, 1.442695
    %v440 = vpow.pop %v439
    %v441 = vmul.f32 %v428, 1.442695
    %v442 = vpow.pop %v441
    %v443 = vmul.f32 %v429, 1.442695
    %v444 = vpow.pop %v443
    %v445 = vmul.f32 %v430, 1.442695
    %v446 = vpow.pop %v445
    %v447 = vadd.f32 %v391, %v432
    %v448 = vadd.f32 %v392, %v434
    %v449 = vadd.f32 %v393, %v436
    %v450 = vadd.f32 %v394, %v438
    %v451 = vadd.f32 %v395, %v440
    %v452 = vadd.f32 %v396, %v442
    %v453 = vadd.f32 %v397, %v444
    %v454 = vadd.f32 %v398, %v446
    %vm455 = vcmp.eq.s32.totalorder %v143, 1
    %vm456 = vcmp.eq.s32.totalorder %v144, 1
    %vm457 = vcmp.eq.s32.totalorder %v145, 1
    %vm458 = vcmp.eq.s32.totalorder %v146, 1
    %vm459 = vcmp.eq.s32.totalorder %v147, 1
    %vm460 = vcmp.eq.s32.totalorder %v148, 1
    %vm461 = vcmp.eq.s32.totalorder %v149, 1
    %vm462 = vcmp.eq.s32.totalorder %v150, 1
    %v463 = vsel %vm455, %v183, 0.0
    %v464 = vsel %vm456, %v184, 0.0
    %v465 = vsel %vm457, %v185, 0.0
    %v466 = vsel %vm458, %v186, 0.0
    %v467 = vsel %vm459, %v187, 0.0
    %v468 = vsel %vm460, %v188, 0.0
    %v469 = vsel %vm461, %v189, 0.0
    %v470 = vsel %vm462, %v190, 0.0
    %v471 = vadd.f32 %v415, %v463
    %v472 = vadd.f32 %v416, %v464
    %v473 = vadd.f32 %v417, %v465
    %v474 = vadd.f32 %v418, %v466
    %v475 = vadd.f32 %v419, %v467
    %v476 = vadd.f32 %v420, %v468
    %v477 = vadd.f32 %v421, %v469
    %v478 = vadd.f32 %v422, %v470
    %v479 = vsub.f32 %v211, %v359
    %v480 = vsub.f32 %v212, %v360
    %v481 = vsub.f32 %v213, %v361
    %v482 = vsub.f32 %v214, %v362
    %v483 = vsub.f32 %v215, %v363
    %v484 = vsub.f32 %v216, %v364
    %v485 = vsub.f32 %v217, %v365
    %v486 = vsub.f32 %v218, %v366
    %v487 = vmul.f32 %v479, 1.442695
    %v488 = vpow.pop %v487
    %v489 = vmul.f32 %v480, 1.442695
    %v490 = vpow.pop %v489
    %v491 = vmul.f32 %v481, 1.442695
    %v492 = vpow.pop %v491
    %v493 = vmul.f32 %v482, 1.442695
    %v494 = vpow.pop %v493
    %v495 = vmul.f32 %v483, 1.442695
    %v496 = vpow.pop %v495
    %v497 = vmul.f32 %v484, 1.442695
    %v498 = vpow.pop %v497
    %v499 = vmul.f32 %v485, 1.442695
    %v500 = vpow.pop %v499
    %v501 = vmul.f32 %v486, 1.442695
    %v502 = vpow.pop %v501
    %v503 = vadd.f32 %v447, %v488
    %v504 = vadd.f32 %v448, %v490
    %v505 = vadd.f32 %v449, %v492
    %v506 = vadd.f32 %v450, %v494
    %v507 = vadd.f32 %v451, %v496
    %v508 = vadd.f32 %v452, %v498
    %v509 = vadd.f32 %v453, %v500
    %v510 = vadd.f32 %v454, %v502
    %vm511 = vcmp.eq.s32.totalorder %v143, 2
    %vm512 = vcmp.eq.s32.totalorder %v144, 2
    %vm513 = vcmp.eq.s32.totalorder %v145, 2
    %vm514 = vcmp.eq.s32.totalorder %v146, 2
    %vm515 = vcmp.eq.s32.totalorder %v147, 2
    %vm516 = vcmp.eq.s32.totalorder %v148, 2
    %vm517 = vcmp.eq.s32.totalorder %v149, 2
    %vm518 = vcmp.eq.s32.totalorder %v150, 2
    %v519 = vsel %vm511, %v211, 0.0
    %v520 = vsel %vm512, %v212, 0.0
    %v521 = vsel %vm513, %v213, 0.0
    %v522 = vsel %vm514, %v214, 0.0
    %v523 = vsel %vm515, %v215, 0.0
    %v524 = vsel %vm516, %v216, 0.0
    %v525 = vsel %vm517, %v217, 0.0
    %v526 = vsel %vm518, %v218, 0.0
    %v527 = vadd.f32 %v471, %v519
    %v528 = vadd.f32 %v472, %v520
    %v529 = vadd.f32 %v473, %v521
    %v530 = vadd.f32 %v474, %v522
    %v531 = vadd.f32 %v475, %v523
    %v532 = vadd.f32 %v476, %v524
    %v533 = vadd.f32 %v477, %v525
    %v534 = vadd.f32 %v478, %v526
    %v535 = vsub.f32 %v239, %v359
    %v536 = vsub.f32 %v240, %v360
    %v537 = vsub.f32 %v241, %v361
    %v538 = vsub.f32 %v242, %v362
    %v539 = vsub.f32 %v243, %v363
    %v540 = vsub.f32 %v244, %v364
    %v541 = vsub.f32 %v245, %v365
    %v542 = vsub.f32 %v246, %v366
    %v543 = vmul.f32 %v535, 1.442695
    %v544 = vpow.pop %v543
    %v545 = vmul.f32 %v536, 1.442695
    %v546 = vpow.pop %v545
    %v547 = vmul.f32 %v537, 1.442695
    %v548 = vpow.pop %v547
    %v549 = vmul.f32 %v538, 1.442695
    %v550 = vpow.pop %v549
    %v551 = vmul.f32 %v539, 1.442695
    %v552 = vpow.pop %v551
    %v553 = vmul.f32 %v540, 1.442695
    %v554 = vpow.pop %v553
    %v555 = vmul.f32 %v541, 1.442695
    %v556 = vpow.pop %v555
    %v557 = vmul.f32 %v542, 1.442695
    %v558 = vpow.pop %v557
    %v559 = vadd.f32 %v503, %v544
    %v560 = vadd.f32 %v504, %v546
    %v561 = vadd.f32 %v505, %v548
    %v562 = vadd.f32 %v506, %v550
    %v563 = vadd.f32 %v507, %v552
    %v564 = vadd.f32 %v508, %v554
    %v565 = vadd.f32 %v509, %v556
    %v566 = vadd.f32 %v510, %v558
    %vm567 = vcmp.eq.s32.totalorder %v143, 3
    %vm568 = vcmp.eq.s32.totalorder %v144, 3
    %vm569 = vcmp.eq.s32.totalorder %v145, 3
    %vm570 = vcmp.eq.s32.totalorder %v146, 3
    %vm571 = vcmp.eq.s32.totalorder %v147, 3
    %vm572 = vcmp.eq.s32.totalorder %v148, 3
    %vm573 = vcmp.eq.s32.totalorder %v149, 3
    %vm574 = vcmp.eq.s32.totalorder %v150, 3
    %v575 = vsel %vm567, %v239, 0.0
    %v576 = vsel %vm568, %v240, 0.0
    %v577 = vsel %vm569, %v241, 0.0
    %v578 = vsel %vm570, %v242, 0.0
    %v579 = vsel %vm571, %v243, 0.0
    %v580 = vsel %vm572, %v244, 0.0
    %v581 = vsel %vm573, %v245, 0.0
    %v582 = vsel %vm574, %v246, 0.0
    %v583 = vadd.f32 %v527, %v575
    %v584 = vadd.f32 %v528, %v576
    %v585 = vadd.f32 %v529, %v577
    %v586 = vadd.f32 %v530, %v578
    %v587 = vadd.f32 %v531, %v579
    %v588 = vadd.f32 %v532, %v580
    %v589 = vadd.f32 %v533, %v581
    %v590 = vadd.f32 %v534, %v582
    %v591 = vsub.f32 %v267, %v359
    %v592 = vsub.f32 %v268, %v360
    %v593 = vsub.f32 %v269, %v361
    %v594 = vsub.f32 %v270, %v362
    %v595 = vsub.f32 %v271, %v363
    %v596 = vsub.f32 %v272, %v364
    %v597 = vsub.f32 %v273, %v365
    %v598 = vsub.f32 %v274, %v366
    %v599 = vmul.f32 %v591, 1.442695
    %v600 = vpow.pop %v599
    %v601 = vmul.f32 %v592, 1.442695
    %v602 = vpow.pop %v601
    %v603 = vmul.f32 %v593, 1.442695
    %v604 = vpow.pop %v603
    %v605 = vmul.f32 %v594, 1.442695
    %v606 = vpow.pop %v605
    %v607 = vmul.f32 %v595, 1.442695
    %v608 = vpow.pop %v607
    %v609 = vmul.f32 %v596, 1.442695
    %v610 = vpow.pop %v609
    %v611 = vmul.f32 %v597, 1.442695
    %v612 = vpow.pop %v611
    %v613 = vmul.f32 %v598, 1.442695
    %v614 = vpow.pop %v613
    %v615 = vadd.f32 %v559, %v600
    %v616 = vadd.f32 %v560, %v602
    %v617 = vadd.f32 %v561, %v604
    %v618 = vadd.f32 %v562, %v606
    %v619 = vadd.f32 %v563, %v608
    %v620 = vadd.f32 %v564, %v610
    %v621 = vadd.f32 %v565, %v612
    %v622 = vadd.f32 %v566, %v614
    %vm623 = vcmp.eq.s32.totalorder %v143, 4
    %vm624 = vcmp.eq.s32.totalorder %v144, 4
    %vm625 = vcmp.eq.s32.totalorder %v145, 4
    %vm626 = vcmp.eq.s32.totalorder %v146, 4
    %vm627 = vcmp.eq.s32.totalorder %v147, 4
    %vm628 = vcmp.eq.s32.totalorder %v148, 4
    %vm629 = vcmp.eq.s32.totalorder %v149, 4
    %vm630 = vcmp.eq.s32.totalorder %v150, 4
    %v631 = vsel %vm623, %v267, 0.0
    %v632 = vsel %vm624, %v268, 0.0
    %v633 = vsel %vm625, %v269, 0.0
    %v634 = vsel %vm626, %v270, 0.0
    %v635 = vsel %vm627, %v271, 0.0
    %v636 = vsel %vm628, %v272, 0.0
    %v637 = vsel %vm629, %v273, 0.0
    %v638 = vsel %vm630, %v274, 0.0
    %v639 = vadd.f32 %v583, %v631
    %v640 = vadd.f32 %v584, %v632
    %v641 = vadd.f32 %v585, %v633
    %v642 = vadd.f32 %v586, %v634
    %v643 = vadd.f32 %v587, %v635
    %v644 = vadd.f32 %v588, %v636
    %v645 = vadd.f32 %v589, %v637
    %v646 = vadd.f32 %v590, %v638
    %v647 = vsub.f32 %v295, %v359
    %v648 = vsub.f32 %v296, %v360
    %v649 = vsub.f32 %v297, %v361
    %v650 = vsub.f32 %v298, %v362
    %v651 = vsub.f32 %v299, %v363
    %v652 = vsub.f32 %v300, %v364
    %v653 = vsub.f32 %v301, %v365
    %v654 = vsub.f32 %v302, %v366
    %v655 = vmul.f32 %v647, 1.442695
    %v656 = vpow.pop %v655
    %v657 = vmul.f32 %v648, 1.442695
    %v658 = vpow.pop %v657
    %v659 = vmul.f32 %v649, 1.442695
    %v660 = vpow.pop %v659
    %v661 = vmul.f32 %v650, 1.442695
    %v662 = vpow.pop %v661
    %v663 = vmul.f32 %v651, 1.442695
    %v664 = vpow.pop %v663
    %v665 = vmul.f32 %v652, 1.442695
    %v666 = vpow.pop %v665
    %v667 = vmul.f32 %v653, 1.442695
    %v668 = vpow.pop %v667
    %v669 = vmul.f32 %v654, 1.442695
    %v670 = vpow.pop %v669
    %v671 = vadd.f32 %v615, %v656
    %v672 = vadd.f32 %v616, %v658
    %v673 = vadd.f32 %v617, %v660
    %v674 = vadd.f32 %v618, %v662
    %v675 = vadd.f32 %v619, %v664
    %v676 = vadd.f32 %v620, %v666
    %v677 = vadd.f32 %v621, %v668
    %v678 = vadd.f32 %v622, %v670
    %vm679 = vcmp.eq.s32.totalorder %v143, 5
    %vm680 = vcmp.eq.s32.totalorder %v144, 5
    %vm681 = vcmp.eq.s32.totalorder %v145, 5
    %vm682 = vcmp.eq.s32.totalorder %v146, 5
    %vm683 = vcmp.eq.s32.totalorder %v147, 5
    %vm684 = vcmp.eq.s32.totalorder %v148, 5
    %vm685 = vcmp.eq.s32.totalorder %v149, 5
    %vm686 = vcmp.eq.s32.totalorder %v150, 5
    %v687 = vsel %vm679, %v295, 0.0
    %v688 = vsel %vm680, %v296, 0.0
    %v689 = vsel %vm681, %v297, 0.0
    %v690 = vsel %vm682, %v298, 0.0
    %v691 = vsel %vm683, %v299, 0.0
    %v692 = vsel %vm684, %v300, 0.0
    %v693 = vsel %vm685, %v301, 0.0
    %v694 = vsel %vm686, %v302, 0.0
    %v695 = vadd.f32 %v639, %v687
    %v696 = vadd.f32 %v640, %v688
    %v697 = vadd.f32 %v641, %v689
    %v698 = vadd.f32 %v642, %v690
    %v699 = vadd.f32 %v643, %v691
    %v700 = vadd.f32 %v644, %v692
    %v701 = vadd.f32 %v645, %v693
    %v702 = vadd.f32 %v646, %v694
    %v703 = vsub.f32 %v323, %v359
    %v704 = vsub.f32 %v324, %v360
    %v705 = vsub.f32 %v325, %v361
    %v706 = vsub.f32 %v326, %v362
    %v707 = vsub.f32 %v327, %v363
    %v708 = vsub.f32 %v328, %v364
    %v709 = vsub.f32 %v329, %v365
    %v710 = vsub.f32 %v330, %v366
    %v711 = vmul.f32 %v703, 1.442695
    %v712 = vpow.pop %v711
    %v713 = vmul.f32 %v704, 1.442695
    %v714 = vpow.pop %v713
    %v715 = vmul.f32 %v705, 1.442695
    %v716 = vpow.pop %v715
    %v717 = vmul.f32 %v706, 1.442695
    %v718 = vpow.pop %v717
    %v719 = vmul.f32 %v707, 1.442695
    %v720 = vpow.pop %v719
    %v721 = vmul.f32 %v708, 1.442695
    %v722 = vpow.pop %v721
    %v723 = vmul.f32 %v709, 1.442695
    %v724 = vpow.pop %v723
    %v725 = vmul.f32 %v710, 1.442695
    %v726 = vpow.pop %v725
    %v727 = vadd.f32 %v671, %v712
    %v728 = vadd.f32 %v672, %v714
    %v729 = vadd.f32 %v673, %v716
    %v730 = vadd.f32 %v674, %v718
    %v731 = vadd.f32 %v675, %v720
    %v732 = vadd.f32 %v676, %v722
    %v733 = vadd.f32 %v677, %v724
    %v734 = vadd.f32 %v678, %v726
    %vm735 = vcmp.eq.s32.totalorder %v143, 6
    %vm736 = vcmp.eq.s32.totalorder %v144, 6
    %vm737 = vcmp.eq.s32.totalorder %v145, 6
    %vm738 = vcmp.eq.s32.totalorder %v146, 6
    %vm739 = vcmp.eq.s32.totalorder %v147, 6
    %vm740 = vcmp.eq.s32.totalorder %v148, 6
    %vm741 = vcmp.eq.s32.totalorder %v149, 6
    %vm742 = vcmp.eq.s32.totalorder %v150, 6
    %v743 = vsel %vm735, %v323, 0.0
    %v744 = vsel %vm736, %v324, 0.0
    %v745 = vsel %vm737, %v325, 0.0
    %v746 = vsel %vm738, %v326, 0.0
    %v747 = vsel %vm739, %v327, 0.0
    %v748 = vsel %vm740, %v328, 0.0
    %v749 = vsel %vm741, %v329, 0.0
    %v750 = vsel %vm742, %v330, 0.0
    %v751 = vadd.f32 %v695, %v743
    %v752 = vadd.f32 %v696, %v744
    %v753 = vadd.f32 %v697, %v745
    %v754 = vadd.f32 %v698, %v746
    %v755 = vadd.f32 %v699, %v747
    %v756 = vadd.f32 %v700, %v748
    %v757 = vadd.f32 %v701, %v749
    %v758 = vadd.f32 %v702, %v750
    %v759 = vsub.f32 %v351, %v359
    %v760 = vsub.f32 %v352, %v360
    %v761 = vsub.f32 %v353, %v361
    %v762 = vsub.f32 %v354, %v362
    %v763 = vsub.f32 %v355, %v363
    %v764 = vsub.f32 %v356, %v364
    %v765 = vsub.f32 %v357, %v365
    %v766 = vsub.f32 %v358, %v366
    %v767 = vmul.f32 %v759, 1.442695
    %v768 = vpow.pop %v767
    %v769 = vmul.f32 %v760, 1.442695
    %v770 = vpow.pop %v769
    %v771 = vmul.f32 %v761, 1.442695
    %v772 = vpow.pop %v771
    %v773 = vmul.f32 %v762, 1.442695
    %v774 = vpow.pop %v773
    %v775 = vmul.f32 %v763, 1.442695
    %v776 = vpow.pop %v775
    %v777 = vmul.f32 %v764, 1.442695
    %v778 = vpow.pop %v777
    %v779 = vmul.f32 %v765, 1.442695
    %v780 = vpow.pop %v779
    %v781 = vmul.f32 %v766, 1.442695
    %v782 = vpow.pop %v781
    %v783 = vadd.f32 %v727, %v768
    %v784 = vadd.f32 %v728, %v770
    %v785 = vadd.f32 %v729, %v772
    %v786 = vadd.f32 %v730, %v774
    %v787 = vadd.f32 %v731, %v776
    %v788 = vadd.f32 %v732, %v778
    %v789 = vadd.f32 %v733, %v780
    %v790 = vadd.f32 %v734, %v782
    %vm791 = vcmp.eq.s32.totalorder %v143, 7
    %vm792 = vcmp.eq.s32.totalorder %v144, 7
    %vm793 = vcmp.eq.s32.totalorder %v145, 7
    %vm794 = vcmp.eq.s32.totalorder %v146, 7
    %vm795 = vcmp.eq.s32.totalorder %v147, 7
    %vm796 = vcmp.eq.s32.totalorder %v148, 7
    %vm797 = vcmp.eq.s32.totalorder %v149, 7
    %vm798 = vcmp.eq.s32.totalorder %v150, 7
    %v799 = vsel %vm791, %v351, 0.0
    %v800 = vsel %vm792, %v352, 0.0
    %v801 = vsel %vm793, %v353, 0.0
    %v802 = vsel %vm794, %v354, 0.0
    %v803 = vsel %vm795, %v355, 0.0
    %v804 = vsel %vm796, %v356, 0.0
    %v805 = vsel %vm797, %v357, 0.0
    %v806 = vsel %vm798, %v358, 0.0
    %v807 = vadd.f32 %v751, %v799
    %v808 = vadd.f32 %v752, %v800
    %v809 = vadd.f32 %v753, %v801
    %v810 = vadd.f32 %v754, %v802
    %v811 = vadd.f32 %v755, %v803
    %v812 = vadd.f32 %v756, %v804
    %v813 = vadd.f32 %v757, %v805
    %v814 = vadd.f32 %v758, %v806
    %v815 = vlog2.pop %v783
    %v816 = vmul.f32 %v815, 0.6931472
    %v817 = vlog2.pop %v784
    %v818 = vmul.f32 %v817, 0.6931472
    %v819 = vlog2.pop %v785
    %v820 = vmul.f32 %v819, 0.6931472
    %v821 = vlog2.pop %v786
    %v822 = vmul.f32 %v821, 0.6931472
    %v823 = vlog2.pop %v787
    %v824 = vmul.f32 %v823, 0.6931472
    %v825 = vlog2.pop %v788
    %v826 = vmul.f32 %v825, 0.6931472
    %v827 = vlog2.pop %v789
    %v828 = vmul.f32 %v827, 0.6931472
    %v829 = vlog2.pop %v790
    %v830 = vmul.f32 %v829, 0.6931472
    %v831 = vadd.f32 %v359, %v816
    %v832 = vadd.f32 %v360, %v818
    %v833 = vadd.f32 %v361, %v820
    %v834 = vadd.f32 %v362, %v822
    %v835 = vadd.f32 %v363, %v824
    %v836 = vadd.f32 %v364, %v826
    %v837 = vadd.f32 %v365, %v828
    %v838 = vadd.f32 %v366, %v830
    %s839 = sadd.s32 0, 0
    %s840 = smul.u32 %s839, 8192
    %v841 = vlaneseq
    %v842 = vshrl.u32 %v841, 7
    %v843 = vadd.s32 %v842, 8
    %v844 = vlaneseq
    %v845 = vand.u32 %v844, 127
    %v846 = vadd.s32 %v845, 128
    %v847 = vadd.s32 %v845, 256
    %v848 = vadd.s32 %v845, 384
    %v849 = vmul.u32 %v842, 512
    %v850 = vmul.u32 %v843, 512
    %v851 = vstv %s840
    %v852 = vadd.s32 %v851, %v849
    %v853 = vadd.s32 %v851, %v850
    %v854 = vadd.s32 %v852, %v845
    %v855 = vadd.s32 %v852, %v846
    %v856 = vadd.s32 %v852, %v847
    %v857 = vadd.s32 %v852, %v848
    %v858 = vadd.s32 %v853, %v845
    %v859 = vadd.s32 %v853, %v846
    %v860 = vadd.s32 %v853, %v847
    %v861 = vadd.s32 %v853, %v848
    %vm862 = vcmp.lt.s32.totalorder %v854, 8192
    %vm863 = vcmp.lt.s32.totalorder %v855, 8192
    %vm864 = vcmp.lt.s32.totalorder %v856, 8192
    %vm865 = vcmp.lt.s32.totalorder %v857, 8192
    %vm866 = vcmp.lt.s32.totalorder %v858, 8192
    %vm867 = vcmp.lt.s32.totalorder %v859, 8192
    %vm868 = vcmp.lt.s32.totalorder %v860, 8192
    %vm869 = vcmp.lt.s32.totalorder %v861, 8192
    %v870 = vsub.f32 %v831, %v807
    %v871 = vsub.f32 %v832, %v808
    %v872 = vsub.f32 %v833, %v809
    %v873 = vsub.f32 %v834, %v810
    %v874 = vsub.f32 %v835, %v811
    %v875 = vsub.f32 %v836, %v812
    %v876 = vsub.f32 %v837, %v813
    %v877 = vsub.f32 %v838, %v814
    %v878 = vsel %vm862, %v870, 0.0
    %v879 = vsel %vm863, %v871, 0.0
    %v880 = vsel %vm864, %v872, 0.0
    %v881 = vsel %vm865, %v873, 0.0
    %v882 = vsel %vm866, %v874, 0.0
    %v883 = vsel %vm867, %v875, 0.0
    %v884 = vsel %vm868, %v876, 0.0
    %v885 = vsel %vm869, %v877, 0.0
    %v886 = vld [vmem:[#allocation7] sm:$0x1]
    %v887 = vadd.f32 %v878, %v879
    %v888 = vadd.f32 %v887, %v880
    %v889 = vadd.f32 %v888, %v881
    %v890 = vadd.f32 %v889, %v882
    %v891 = vadd.f32 %v890, %v883
    %v892 = vadd.f32 %v891, %v884
    %v893 = vadd.f32 %v892, %v885
    %894 = vadd.xlane.f32.xlu0 %v893
    %v895 = vpop.xlane.xlu0 %894
    %v896 = vrot.slane %v895, 4
    %v897 = vadd.f32 %v895, %v896
    %v898 = vrot.slane %v897, 2
    %v899 = vadd.f32 %v897, %v898
    %v900 = vrot.slane %v899, 1
    %v901 = vadd.f32 %v899, %v900
    %s902 = vtos %v901
    %v903 = vstv %s902
    %v904 = vadd.f32 %v886, %v903
    %vm905 = vcmask 0
    %906 = vst.msk [vmem:[#allocation7] sm:$0x1] %vm905, %v904
    // Predicated region
    $region30: #{segmentation_loss.1} parent=1 // pred_check
      _
    $region31: #{segmentation_loss.1} parent=1 // pred_check_branch
      %908 = sbr.rel (0) target = $region33
    $region32: #{segmentation_loss.1} parent=1 // pred_region
      %s910 = ssub.s32 16, 16
      %911 = vsyncadd [#allocation3], %s910
      %s913 = sshll.u32 [#allocation7], 4
      %s914 = int_to_ptr.vmem [resolvable:$true] %s913
      %916 = dma.vmem_to_hbm [thread:$0]  %s914, 16, %s4, [#allocation3]
    $region33: #{segmentation_loss.1} parent=1 // pred_fallthru
      _
    // Predicated region
    $region34: #{segmentation_loss.1} parent=1 // pred_check
      _
    $region35: #{segmentation_loss.1} parent=1 // pred_check_branch
      %918 = sbr.rel (0) target = $region37
    $region36: #{segmentation_loss.1} parent=1 // pred_region
      %919 = dma.done [#allocation3], 16
    $region37: #{segmentation_loss.1} parent=1 // pred_fallthru
      _
    %920 = vsyncpa [#allocation3], 1
    %921 = vsyncpa [#allocation4], 1
    %922 = vsyncpa [#allocation6], 1

</llo_original>
